<compile_context>
chip_gen: v5e
topology: v5e:2x2
jax: 0.10.0
libtpu: 0.0.40
codegen_flags: <defaults>
</compile_context>

<pallas_src>
import jax
import jax.numpy as jnp
from jax.experimental import pallas as pl
from jax.experimental.pallas import tpu as pltpu


def _round_up(x, m):
    return pl.cdiv(x, m) * m


def actor_kernel(x_ref, w1_ref, b1_ref, w2_ref, b2_ref, w3_ref, b3_ref, out_ref):
    """Fused MLP (Linear->ReLU->Linear->ReLU->Linear) + row softmax.

    x arrives as f32 and is cast to bf16 on the VPU; matmuls run with bf16
    operands on the MXU with f32 accumulation; bias/ReLU/softmax are f32.
    """
    x = x_ref[...].astype(jnp.bfloat16)  # in-kernel cast (free under MXU/EUP)

    # Hidden layer 1: Linear + ReLU
    h1 = jnp.dot(x, w1_ref[...], preferred_element_type=jnp.float32) + b1_ref[...]
    h1 = jnp.maximum(h1, 0.0)

    # Hidden layer 2: Linear + ReLU
    h2 = jnp.dot(h1.astype(jnp.bfloat16), w2_ref[...],
                 preferred_element_type=jnp.float32) + b2_ref[...]
    h2 = jnp.maximum(h2, 0.0)

    # Output layer: Linear (true action width, no lane padding)
    logits = jnp.dot(h2.astype(jnp.bfloat16), w3_ref[...],
                     preferred_element_type=jnp.float32) + b3_ref[...]

    # Numerically-stable softmax along the action axis.  Exact divide so rows
    # sum to 1.0 (needed by downstream Categorical sampling); cost is noise.
    m = jnp.max(logits, axis=-1, keepdims=True)
    e = jnp.exp(logits - m)
    denom = jnp.sum(e, axis=-1, keepdims=True)
    out_ref[...] = (e / denom).astype(out_ref.dtype)


def prepare_actor_params(params):
    """One-time parameter prep hoisted out of the per-call hot path.

    Weights become bf16 MXU operands; biases stay f32 (added post-accumulate).
    """
    return {
        "w1": params["w1"].astype(jnp.bfloat16),
        "b1": params["b1"].astype(jnp.float32),
        "w2": params["w2"].astype(jnp.bfloat16),
        "b2": params["b2"].astype(jnp.float32),
        "w3": params["w3"].astype(jnp.bfloat16),
        "b3": params["b3"].astype(jnp.float32),
    }


def actor_forward(state, params, *, batch_tile=1024):
    """state: [B, D] f32; params: prepared (bf16 weights / f32 biases).

    Returns [B, A] f32 softmax probabilities.
    """
    w1, b1, w2, b2, w3, b3 = (
        params["w1"], params["b1"], params["w2"],
        params["b2"], params["w3"], params["b3"],
    )
    B, D = state.shape
    A = w3.shape[1]

    # ---- batch tiling ------------------------------------------------------
    # Round the tile to 16 rows (bf16 sublane packing after the in-kernel
    # cast), keep padding waste small, and keep the tile count even so the
    # batch grid balances across both TensorCores on v7x.
    batch_tile = max(16, _round_up(int(batch_tile), 16))
    b_pad16 = _round_up(B, 16)
    num_tiles = pl.cdiv(b_pad16, batch_tile)
    if num_tiles > 1 and num_tiles % 2 == 1:
        num_tiles += 1                     # even grid -> megacore balance on v7x
    TB = _round_up(pl.cdiv(b_pad16, num_tiles), 16)
    B_pad = TB * num_tiles

    x = state
    if B_pad != B:
        # Row pad only (no dtype convert): <~5% extra rows by construction.
        x = jnp.pad(x, ((0, B_pad - B), (0, 0)))

    # VMEM-resident weights/biases: constant index_map keeps them in VMEM
    # across grid steps.
    # NOTE: if hidden widths grow to 1k+, add pipeline_mode=pl.Buffered(1) to
    # these resident specs to halve their VMEM footprint (matters first on
    # v7x's 64 MiB VMEM / 32 MiB scoped default).
    resident = lambda arr: pl.BlockSpec(arr.shape, lambda i: (0,) * arr.ndim)

    # Explicit scoped-VMEM budget: double-buffered streamed tiles + (default
    # double-buffered) resident weights, with headroom.
    tile_bytes = 2 * TB * (D + A) * 4
    weight_bytes = 2 * sum(int(a.size) * a.dtype.itemsize
                           for a in (w1, b1, w2, b2, w3, b3))
    vmem_limit = int(min(max(4 * (tile_bytes + weight_bytes), 32 << 20), 48 << 20))

    out = pl.pallas_call(
        actor_kernel,
        out_shape=jax.ShapeDtypeStruct((B_pad, A), jnp.float32),
        grid=(num_tiles,),
        in_specs=[
            pl.BlockSpec((TB, D), lambda i: (i, 0)),   # streamed f32 batch tile
            resident(w1), resident(b1),
            resident(w2), resident(b2),
            resident(w3), resident(b3),
        ],
        # Lane dim of the block equals the full array width (A), so no lane
        # padding is needed; writeback is the true (TB, A) f32 slab.
        out_specs=pl.BlockSpec((TB, A), lambda i: (i, 0)),
        compiler_params=pltpu.CompilerParams(
            dimension_semantics=("parallel",),         # megacore split on v7x
            vmem_limit_bytes=vmem_limit,
        ),
    )(x, w1, b1, w2, b2, w3, b3)

    return out if B_pad == B else out[:B]


def xavier_uniform(key, fan_in, fan_out, dtype=jnp.float32):
    bound = jnp.sqrt(6.0 / (fan_in + fan_out))
    return jax.random.uniform(key, (fan_in, fan_out), dtype, -bound, bound)


def init_actor_params(key, state_dim, hidden_layers, action_dim):
    dims = [state_dim] + list(hidden_layers) + [action_dim]
    keys = jax.random.split(key, len(dims) - 1)
    params = {}
    for i, (din, dout) in enumerate(zip(dims[:-1], dims[1:]), start=1):
        params[f"w{i}"] = xavier_uniform(keys[i - 1], din, dout)   # xavier_uniform_
        params[f"b{i}"] = jnp.zeros((1, dout), jnp.float32)        # zeros_
    return params


def actor_reference(state, params):
    """Pure-JAX f32 reference (PyTorch semantics) for validation."""
    h = state
    h = jnp.maximum(h @ params["w1"] + params["b1"], 0.0)
    h = jnp.maximum(h @ params["w2"] + params["b2"], 0.0)
    logits = h @ params["w3"] + params["b3"]
    return jax.nn.softmax(logits, axis=-1)


if __name__ == "__main__":
    # Small shapes consistent with the 'latent' input path: state [B, E*2]
    B, STATE_DIM, ACTION_DIM = 2, 32, 8
    HIDDEN_LAYERS = [32, 32]   # config.agent.actor.layers

    root = jax.random.PRNGKey(0)
    k_state, k_params, k_big = jax.random.split(root, 3)

    state = jax.random.normal(k_state, (B, STATE_DIM), jnp.float32)
    params_f32 = init_actor_params(k_params, STATE_DIM, HIDDEN_LAYERS, ACTION_DIM)
    params = prepare_actor_params(params_f32)      # one-time, outside hot path

    actor_fn = jax.jit(actor_forward)

    probs = jax.block_until_ready(actor_fn(state, params))
    ref = actor_reference(state, params_f32)

    assert probs.shape == (B, ACTION_DIM)
    # bf16 MXU operands => compare loosely vs f32 reference.
    assert jnp.allclose(probs, ref, atol=2e-2), float(jnp.max(jnp.abs(probs - ref)))
    # Exact-divide softmax => rows sum to 1 to f32 rounding.
    assert jnp.allclose(jnp.sum(probs, axis=-1), 1.0, atol=1e-3)

    # Exercise the multi-tile batch grid + batch-padding path.
    B2 = 1030
    state2 = jax.random.normal(k_big, (B2, STATE_DIM), jnp.float32)
    probs2 = jax.block_until_ready(actor_fn(state2, params))
    ref2 = actor_reference(state2, params_f32)
    assert probs2.shape == (B2, ACTION_DIM)
    assert jnp.allclose(probs2, ref2, atol=2e-2), float(jnp.max(jnp.abs(probs2 - ref2)))
    assert jnp.allclose(jnp.sum(probs2, axis=-1), 1.0, atol=1e-3)

    print("KERNEL_OK")
</pallas_src>

<mosaic_0001>
module attributes {stable_mosaic.version = 11 : i64} {
  func.func @actor_kernel(%arg0: i32, %arg1: memref<16x32xf32, #tpu.memory_space<vmem>>, %arg2: memref<32x32xbf16, #tpu.memory_space<vmem>>, %arg3: memref<1x32xf32, #tpu.memory_space<vmem>>, %arg4: memref<32x32xbf16, #tpu.memory_space<vmem>>, %arg5: memref<1x32xf32, #tpu.memory_space<vmem>>, %arg6: memref<32x8xbf16, #tpu.memory_space<vmem>>, %arg7: memref<1x8xf32, #tpu.memory_space<vmem>>, %arg8: memref<16x8xf32, #tpu.memory_space<vmem>>) attributes {dimension_semantics = [#tpu.dimension_semantics<parallel>], iteration_bounds = array<i64: 1>, scalar_prefetch = 0 : i64, scratch_operands = 0 : i64, tpu.core_type = #tpu.core_type<tc>, window_params = [{transform_indices = @transform_0, window_bounds = array<i64: 16, 32>}, {pipeline_mode = #tpu.pipeline_mode<synchronous>, transform_indices = @transform_1, window_bounds = array<i64: 32, 32>}, {pipeline_mode = #tpu.pipeline_mode<synchronous>, transform_indices = @transform_2, window_bounds = array<i64: 1, 32>}, {pipeline_mode = #tpu.pipeline_mode<synchronous>, transform_indices = @transform_3, window_bounds = array<i64: 32, 32>}, {pipeline_mode = #tpu.pipeline_mode<synchronous>, transform_indices = @transform_4, window_bounds = array<i64: 1, 32>}, {pipeline_mode = #tpu.pipeline_mode<synchronous>, transform_indices = @transform_5, window_bounds = array<i64: 32, 8>}, {pipeline_mode = #tpu.pipeline_mode<synchronous>, transform_indices = @transform_6, window_bounds = array<i64: 1, 8>}, {transform_indices = @transform_7, window_bounds = array<i64: 16, 8>}]} {
    %c0 = arith.constant 0 : index
    %c0_0 = arith.constant 0 : index
    %0 = vector.load %arg1[%c0, %c0_0] : memref<16x32xf32, #tpu.memory_space<vmem>>, vector<16x32xf32>
    %1 = arith.truncf %0 : vector<16x32xf32> to vector<16x32xbf16>
    %c0_1 = arith.constant 0 : index
    %c0_2 = arith.constant 0 : index
    %2 = vector.load %arg2[%c0_1, %c0_2] : memref<32x32xbf16, #tpu.memory_space<vmem>>, vector<32x32xbf16>
    %cst = arith.constant dense<0.000000e+00> : vector<16x32xf32>
    %3 = tpu.matmul %1, %2, %cst {dimension_numbers = #tpu.dot_dimension_numbers<[1], [0], [0], [1], [0, 0, 1, 1], [], []>} : vector<16x32xbf16>, vector<32x32xbf16>, vector<16x32xf32> -> vector<16x32xf32>
    %c0_3 = arith.constant 0 : index
    %c0_4 = arith.constant 0 : index
    %4 = vector.load %arg3[%c0_3, %c0_4] : memref<1x32xf32, #tpu.memory_space<vmem>>, vector<1x32xf32>
    %5 = vector.broadcast %4 : vector<1x32xf32> to vector<16x32xf32>
    %6 = arith.addf %3, %5 : vector<16x32xf32>
    %cst_5 = arith.constant 0.000000e+00 : f32
    %7 = vector.broadcast %cst_5 : f32 to vector<16x32xf32>
    %8 = arith.maximumf %6, %7 : vector<16x32xf32>
    %9 = arith.truncf %8 : vector<16x32xf32> to vector<16x32xbf16>
    %c0_6 = arith.constant 0 : index
    %c0_7 = arith.constant 0 : index
    %10 = vector.load %arg4[%c0_6, %c0_7] : memref<32x32xbf16, #tpu.memory_space<vmem>>, vector<32x32xbf16>
    %cst_8 = arith.constant dense<0.000000e+00> : vector<16x32xf32>
    %11 = tpu.matmul %9, %10, %cst_8 {dimension_numbers = #tpu.dot_dimension_numbers<[1], [0], [0], [1], [0, 0, 1, 1], [], []>} : vector<16x32xbf16>, vector<32x32xbf16>, vector<16x32xf32> -> vector<16x32xf32>
    %c0_9 = arith.constant 0 : index
    %c0_10 = arith.constant 0 : index
    %12 = vector.load %arg5[%c0_9, %c0_10] : memref<1x32xf32, #tpu.memory_space<vmem>>, vector<1x32xf32>
    %13 = vector.broadcast %12 : vector<1x32xf32> to vector<16x32xf32>
    %14 = arith.addf %11, %13 : vector<16x32xf32>
    %cst_11 = arith.constant 0.000000e+00 : f32
    %15 = vector.broadcast %cst_11 : f32 to vector<16x32xf32>
    %16 = arith.maximumf %14, %15 : vector<16x32xf32>
    %17 = arith.truncf %16 : vector<16x32xf32> to vector<16x32xbf16>
    %c0_12 = arith.constant 0 : index
    %c0_13 = arith.constant 0 : index
    %18 = vector.load %arg6[%c0_12, %c0_13] : memref<32x8xbf16, #tpu.memory_space<vmem>>, vector<32x8xbf16>
    %cst_14 = arith.constant dense<0.000000e+00> : vector<16x8xf32>
    %19 = tpu.matmul %17, %18, %cst_14 {dimension_numbers = #tpu.dot_dimension_numbers<[1], [0], [0], [1], [0, 0, 1, 1], [], []>} : vector<16x32xbf16>, vector<32x8xbf16>, vector<16x8xf32> -> vector<16x8xf32>
    %c0_15 = arith.constant 0 : index
    %c0_16 = arith.constant 0 : index
    %20 = vector.load %arg7[%c0_15, %c0_16] : memref<1x8xf32, #tpu.memory_space<vmem>>, vector<1x8xf32>
    %21 = vector.broadcast %20 : vector<1x8xf32> to vector<16x8xf32>
    %22 = arith.addf %19, %21 : vector<16x8xf32>
    %cst_17 = arith.constant dense<0xFF800000> : vector<16xf32>
    %23 = vector.multi_reduction <maximumf>, %22, %cst_17 [1] : vector<16x8xf32> to vector<16xf32>
    %24 = vector.shape_cast %23 : vector<16xf32> to vector<16x1xf32>
    %25 = vector.broadcast %24 : vector<16x1xf32> to vector<16x8xf32>
    %26 = arith.subf %22, %25 : vector<16x8xf32>
    %27 = math.exp %26 : vector<16x8xf32>
    %cst_18 = arith.constant dense<0.000000e+00> : vector<16xf32>
    %28 = vector.multi_reduction <add>, %27, %cst_18 [1] : vector<16x8xf32> to vector<16xf32>
    %29 = vector.shape_cast %28 : vector<16xf32> to vector<16x1xf32>
    %30 = vector.broadcast %29 : vector<16x1xf32> to vector<16x8xf32>
    %31 = arith.divf %27, %30 : vector<16x8xf32>
    %c0_19 = arith.constant 0 : index
    %c0_20 = arith.constant 0 : index
    %32 = vector.load %arg8[%c0_19, %c0_20] : memref<16x8xf32, #tpu.memory_space<vmem>>, vector<16x8xf32>
    tpu.vector_store %arg8[%c0_19, %c0_20], %31 {strides = array<i32>} : memref<16x8xf32, #tpu.memory_space<vmem>>, vector<16x8xf32>,
    return
  }
  func.func @transform_0(%arg0: i32) -> (i32, i32) {
    %c0_i32 = arith.constant 0 : i32
    %c0_i32_0 = arith.constant 0 : i32
    return %arg0, %c0_i32 : i32, i32
  }
  func.func @transform_1(%arg0: i32) -> (i32, i32) {
    %c0_i32 = arith.constant 0 : i32
    %c0_i32_0 = arith.constant 0 : i32
    %c0_i32_1 = arith.constant 0 : i32
    return %c0_i32, %c0_i32_0 : i32, i32
  }
  func.func @transform_2(%arg0: i32) -> (i32, i32) {
    %c0_i32 = arith.constant 0 : i32
    %c0_i32_0 = arith.constant 0 : i32
    %c0_i32_1 = arith.constant 0 : i32
    return %c0_i32, %c0_i32_0 : i32, i32
  }
  func.func @transform_3(%arg0: i32) -> (i32, i32) {
    %c0_i32 = arith.constant 0 : i32
    %c0_i32_0 = arith.constant 0 : i32
    %c0_i32_1 = arith.constant 0 : i32
    return %c0_i32, %c0_i32_0 : i32, i32
  }
  func.func @transform_4(%arg0: i32) -> (i32, i32) {
    %c0_i32 = arith.constant 0 : i32
    %c0_i32_0 = arith.constant 0 : i32
    %c0_i32_1 = arith.constant 0 : i32
    return %c0_i32, %c0_i32_0 : i32, i32
  }
  func.func @transform_5(%arg0: i32) -> (i32, i32) {
    %c0_i32 = arith.constant 0 : i32
    %c0_i32_0 = arith.constant 0 : i32
    %c0_i32_1 = arith.constant 0 : i32
    return %c0_i32, %c0_i32_0 : i32, i32
  }
  func.func @transform_6(%arg0: i32) -> (i32, i32) {
    %c0_i32 = arith.constant 0 : i32
    %c0_i32_0 = arith.constant 0 : i32
    %c0_i32_1 = arith.constant 0 : i32
    return %c0_i32, %c0_i32_0 : i32, i32
  }
  func.func @transform_7(%arg0: i32) -> (i32, i32) {
    %c0_i32 = arith.constant 0 : i32
    %c0_i32_0 = arith.constant 0 : i32
    return %arg0, %c0_i32 : i32, i32
  }
}

</mosaic_0001>

<llo_original>
// kernel: actor_forward.1
$region0: #{actor_forward.1}
  #allocation0 [shape = 'u32[]', space=smem, size = 0x4, offset = 0x4, fixed_abs, tag = 'smem constant byte address 0x4 - core index']
  #allocation1 [shape = 'u32[72,128]{1,0:T(1,128)}', space=vmem, size = 0x9000, scoped, tag = 'internal scratch']
  %s0 = inlined_call_operand.vmem [shape: f32[16,32], index: 0, kind: input, shape index: {}]
  %s1 = inlined_call_operand.vmem [shape: bf16[32,32], index: 1, kind: input, shape index: {}]
  %s2 = inlined_call_operand.vmem [shape: f32[1,32], index: 2, kind: input, shape index: {}]
  %s3 = inlined_call_operand.vmem [shape: bf16[32,32], index: 3, kind: input, shape index: {}]
  %s4 = inlined_call_operand.vmem [shape: f32[1,32], index: 4, kind: input, shape index: {}]
  %s5 = inlined_call_operand.vmem [shape: bf16[32,8], index: 5, kind: input, shape index: {}]
  %s6 = inlined_call_operand.vmem [shape: f32[1,8], index: 6, kind: input, shape index: {}]
  %s7 = inlined_call_operand.vmem [shape: f32[16,8], index: 7, kind: output, shape index: {}]
  %s8 = sld [smem:[#allocation0]]
  $region38: #{actor_forward.1} parent=0
    _
  %s10 = ssub.s32 1, %s8
  %s11 = scalar_select 0, %s10, %s8
  // Predicated region
  $region2: #{actor_forward.1} parent=0 // pred_check
    _
  $region3: #{actor_forward.1} parent=0 // pred_check_branch
    %13 = sbr.rel (0) target = $region5
  $region4: #{actor_forward.1} parent=0 // pred_region
    _
  $region5: #{actor_forward.1} parent=0 // pred_fallthru
    _
  // Predicated region
  $region6: #{actor_forward.1} parent=0 // pred_check
    _
  $region7: #{actor_forward.1} parent=0 // pred_check_branch
    %15 = sbr.rel (0) target = $region9
  $region8: #{actor_forward.1} parent=0 // pred_region
    _
  $region9: #{actor_forward.1} parent=0 // pred_fallthru
    _
  // Predicated region
  $region10: #{actor_forward.1} parent=0 // pred_check
    _
  $region11: #{actor_forward.1} parent=0 // pred_check_branch
    %17 = sbr.rel (0) target = $region13
  $region12: #{actor_forward.1} parent=0 // pred_region
    _
  $region13: #{actor_forward.1} parent=0 // pred_fallthru
    _
  // Predicated region
  $region14: #{actor_forward.1} parent=0 // pred_check
    _
  $region15: #{actor_forward.1} parent=0 // pred_check_branch
    %19 = sbr.rel (0) target = $region17
  $region16: #{actor_forward.1} parent=0 // pred_region
    _
  $region17: #{actor_forward.1} parent=0 // pred_fallthru
    _
  // Predicated region
  $region18: #{actor_forward.1} parent=0 // pred_check
    _
  $region19: #{actor_forward.1} parent=0 // pred_check_branch
    %21 = sbr.rel (0) target = $region21
  $region20: #{actor_forward.1} parent=0 // pred_region
    _
  $region21: #{actor_forward.1} parent=0 // pred_fallthru
    _
  // Predicated region
  $region22: #{actor_forward.1} parent=0 // pred_check
    _
  $region23: #{actor_forward.1} parent=0 // pred_check_branch
    %23 = sbr.rel (0) target = $region25
  $region24: #{actor_forward.1} parent=0 // pred_region
    _
  $region25: #{actor_forward.1} parent=0 // pred_fallthru
    _
  // Predicated region
  $region26: #{actor_forward.1} parent=0 // pred_check
    _
  $region27: #{actor_forward.1} parent=0 // pred_check_branch
    %25 = sbr.rel (0) target = $region29
  $region28: #{actor_forward.1} parent=0 // pred_region
    _
  $region29: #{actor_forward.1} parent=0 // pred_fallthru
    _
  %v27 = vld [vmem:[%s0] sm:$0xff]
  %v28 = vld [vmem:[%s0 + $0x8] sm:$0xff]
  %v29 = vpack.c.bf16 %v28, %v27
  %v30 = vld [vmem:[%s1] sm:$0xf]
  %v31 = vld [vmem:[%s1 + $0x4] sm:$0xf]
  %v32 = vld [vmem:[%s1 + $0x8] sm:$0xf]
  %v33 = vld [vmem:[%s1 + $0xc] sm:$0xf]
  %v34 = vld [vmem:[%s2] sm:$0x1]
  %v36 = vperm.slane %v34, 0
  %v42 = vunpack.c.l.b16 %v30
  %v43 = vunpack.c.l.b16 %v31
  %v44 = vunpack.c.l.b16 %v32
  %v45 = vunpack.c.l.b16 %v33
  %v46 = vpack.c.b16 %v43, %v42
  %v47 = vpack.c.b16 %v45, %v44
  %vm50 = vcmask 261120
  %v52 = vsel %vm50, %v29, 0
  %54 = vmatpush.bf16.msra.mxu0 0
  %55 = vmatpush.bf16.msra.mxu0 0
  %56 = vmatpush.bf16.msra.mxu0 0
  %57 = vmatpush.bf16.msra.mxu0 0
  %58 = vmatpush.bf16.msra.mxu0 0
  %59 = vmatpush.bf16.msra.mxu0 0
  %60 = vmatpush.bf16.msra.mxu0 %v47
  %61 = vmatpush.bf16.msra.mxu0 %v46
  %62 = vmatmul.bf16.gmra.mxu0 %v52
  %v63 = vpop.f32.mrf.mxu0
  %v64 = vadd.f32 %v36, %v63
  %v65 = vpop.f32.mrf.mxu0
  %v66 = vadd.f32 %v36, %v65
  %67 = vdwg.mxu0
  %v68 = vmax.f32 %v64, 0.0
  %v69 = vmax.f32 %v66, 0.0
  %v70 = vpack.c.bf16 %v69, %v68
  %v71 = vld [vmem:[%s3] sm:$0xf]
  %v72 = vld [vmem:[%s3 + $0x4] sm:$0xf]
  %v73 = vld [vmem:[%s3 + $0x8] sm:$0xf]
  %v74 = vld [vmem:[%s3 + $0xc] sm:$0xf]
  %v75 = vld [vmem:[%s4] sm:$0x1]
  %v77 = vperm.slane %v75, 0
  %v83 = vunpack.c.l.b16 %v71
  %v84 = vunpack.c.l.b16 %v72
  %v85 = vunpack.c.l.b16 %v73
  %v86 = vunpack.c.l.b16 %v74
  %v87 = vpack.c.b16 %v84, %v83
  %v88 = vpack.c.b16 %v86, %v85
  %v92 = vsel %vm50, %v70, 0
  %94 = vmatpush.bf16.msra.mxu0 0
  %95 = vmatpush.bf16.msra.mxu0 0
  %96 = vmatpush.bf16.msra.mxu0 0
  %97 = vmatpush.bf16.msra.mxu0 0
  %98 = vmatpush.bf16.msra.mxu0 0
  %99 = vmatpush.bf16.msra.mxu0 0
  %100 = vmatpush.bf16.msra.mxu0 %v88
  %101 = vmatpush.bf16.msra.mxu0 %v87
  %102 = vmatmul.bf16.gmra.mxu0 %v92
  %v103 = vpop.f32.mrf.mxu0
  %v104 = vadd.f32 %v77, %v103
  %v105 = vpop.f32.mrf.mxu0
  %v106 = vadd.f32 %v77, %v105
  %107 = vdwg.mxu0
  %v108 = vmax.f32 %v104, 0.0
  %v109 = vmax.f32 %v106, 0.0
  %v110 = vpack.c.bf16 %v109, %v108
  %v111 = vld [vmem:[%s5] sm:$0xf]
  %v112 = vld [vmem:[%s5 + $0x4] sm:$0xf]
  %v113 = vld [vmem:[%s5 + $0x8] sm:$0xf]
  %v114 = vld [vmem:[%s5 + $0xc] sm:$0xf]
  %v115 = vld [vmem:[%s6] sm:$0x1]
  %v117 = vperm.slane %v115, 0
  %v123 = vunpack.c.l.b16 %v111
  %v124 = vunpack.c.l.b16 %v112
  %v125 = vunpack.c.l.b16 %v113
  %v126 = vunpack.c.l.b16 %v114
  %v127 = vpack.c.b16 %v124, %v123
  %v128 = vpack.c.b16 %v126, %v125
  %v132 = vsel %vm50, %v110, 0
  %134 = vmatpush.bf16.msra.mxu0 0
  %135 = vmatpush.bf16.msra.mxu0 0
  %136 = vmatpush.bf16.msra.mxu0 0
  %137 = vmatpush.bf16.msra.mxu0 0
  %138 = vmatpush.bf16.msra.mxu0 0
  %139 = vmatpush.bf16.msra.mxu0 0
  %140 = vmatpush.bf16.msra.mxu0 %v128
  %141 = vmatpush.bf16.msra.mxu0 %v127
  %142 = vmatmul.bf16.gmra.mxu0 %v132
  %v143 = vpop.f32.mrf.mxu0
  %v144 = vadd.f32 %v117, %v143
  %v145 = vpop.f32.mrf.mxu0
  %v146 = vadd.f32 %v117, %v145
  %147 = vdwg.mxu0
  %vm148 = vcmask 64512
  %v149 = vsel %vm148, %v144, -inf
  %150 = vmax.xlane.f32.xlu0 %v149
  %v151 = vpop.xlane.xlu0 %150
  %v152 = vsel %vm148, %v146, -inf
  %153 = vmax.xlane.f32.xlu0 %v152
  %v154 = vpop.xlane.xlu0 %153
  %v155 = vsub.f32 %v144, %v151
  %v156 = vsub.f32 %v146, %v154
  %v157 = vmul.f32 %v155, 1.442695
  %v158 = vpow.pop %v157
  %v159 = vmul.f32 %v156, 1.442695
  %v160 = vpow.pop %v159
  %v161 = vsel %vm148, %v158, 0.0
  %162 = vadd.xlane.f32.xlu0 %v161
  %v163 = vpop.xlane.xlu0 %162
  %v164 = vsel %vm148, %v160, 0.0
  %165 = vadd.xlane.f32.xlu0 %v164
  %v166 = vpop.xlane.xlu0 %165
  %v167 = vrcp.pop %v163
  %v168 = vmul.f32 %v163, %v167
  %v169 = vsub.f32 1.0, %v168
  %v170 = vmul.f32 %v167, %v169
  %v171 = vadd.f32 %v167, %v170
  %vm172 = vweird.f32 %v163
  %vm173 = vweird.f32 %v167
  %vm174 = vmor %vm172, %vm173
  %v175 = vsel %vm174, %v167, %v171
  %v176 = vand.u32 2147483647, %v163
  %vm177 = vcmp.eq.f32.partialorder %v176, 8.507059e+37
  %v178 = vand.u32 %v163, 2147483648
  %v179 = vor.u32 1.1754944e-38, %v178
  %v180 = vsel %vm177, %v179, %v175
  %v181 = vmul.f32 %v158, %v180
  %v182 = vrcp.pop %v166
  %v183 = vmul.f32 %v166, %v182
  %v184 = vsub.f32 1.0, %v183
  %v185 = vmul.f32 %v182, %v184
  %v186 = vadd.f32 %v182, %v185
  %vm187 = vweird.f32 %v166
  %vm188 = vweird.f32 %v182
  %vm189 = vmor %vm187, %vm188
  %v190 = vsel %vm189, %v182, %v186
  %v191 = vand.u32 2147483647, %v166
  %vm192 = vcmp.eq.f32.partialorder %v191, 8.507059e+37
  %v193 = vand.u32 %v166, 2147483648
  %v194 = vor.u32 1.1754944e-38, %v193
  %v195 = vsel %vm192, %v194, %v190
  %v196 = vmul.f32 %v160, %v195
  %197 = vst.msk [vmem:[%s7] sm:$0xff] %vm148, %v181
  %198 = vst.msk [vmem:[%s7 + $0x8] sm:$0xff] %vm148, %v196
  // Predicated region
  $region30: #{actor_forward.1} parent=0 // pred_check
    _
  $region31: #{actor_forward.1} parent=0 // pred_check_branch
    %200 = sbr.rel (0) target = $region33
  $region32: #{actor_forward.1} parent=0 // pred_region
    _
  $region33: #{actor_forward.1} parent=0 // pred_fallthru
    _
  // Predicated region
  $region34: #{actor_forward.1} parent=0 // pred_check
    _
  $region35: #{actor_forward.1} parent=0 // pred_check_branch
    %202 = sbr.rel (0) target = $region37
  $region36: #{actor_forward.1} parent=0 // pred_region
    _
  $region37: #{actor_forward.1} parent=0 // pred_fallthru
    _

</llo_original>
